<compile_context>
chip_gen: v6e
topology: v6e:2x2x1
jax: 0.10.0
libtpu: 0.0.40
codegen_flags: <defaults>
</compile_context>

<pallas_src>
import math

import jax
import jax.numpy as jnp
from jax.experimental import pallas as pl
from jax.experimental.pallas import tpu as pltpu

QUANTIZATION_CHANNELS = 64
MU = float(QUANTIZATION_CHANNELS - 1)          # 63.0
LOG1P_MU = math.log1p(MU)                      # log(64)

# Constant-folded coefficients.
ENC_SCALE = (MU * 0.5) / LOG1P_MU              # 31.5 / log(64)
ENC_BIAS = MU * 0.5 + 0.5                      # 32.0
DEC_CENTER = MU * 0.5                          # 31.5
DEC_SCALE = 2.0 * LOG1P_MU / MU                # 2*log(64)/63
INV_MU = 1.0 / MU

_LANE_CANDIDATES = (2048, 1024, 512, 256, 128)


def _cdiv(a, b):
    return -(-a // b)


def _round_up(a, b):
    return _cdiv(a, b) * b


def _apply_sign(mag, sign_src):
    """copysign(mag, sign_src) for mag >= 0 via a sign-bit OR (2 VPU bit ops)."""
    sign_bits = pltpu.bitcast(sign_src, jnp.uint32) & jnp.uint32(0x80000000)
    return pltpu.bitcast(pltpu.bitcast(mag, jnp.uint32) | sign_bits, jnp.float32)


def codec_sim_kernel(x_ref, o_ref):
    x = x_ref[...].astype(jnp.float32)

    # --- MuLawEncoding (folded): q = floor(copysign(log1p(63|x|)*ENC_SCALE, x) + 32) ---
    enc_mag = jnp.log1p(jnp.float32(MU) * jnp.abs(x)) * jnp.float32(ENC_SCALE)
    enc = _apply_sign(enc_mag, x)
    # floor == torch's trunc here: the argument lies in [0.5, 63.5] for |x| <= 1.
    q = jnp.floor(enc + jnp.float32(ENC_BIAS))

    # --- MuLawDecoding (folded): out = copysign((exp(|t|*DEC_SCALE)-1)/63, t), t=q-31.5 ---
    t = q - jnp.float32(DEC_CENTER)
    dec_mag = (jnp.exp(jnp.abs(t) * jnp.float32(DEC_SCALE)) - 1.0) * jnp.float32(INV_MU)
    o_ref[...] = _apply_sign(dec_mag, t).astype(o_ref.dtype)


def _mu_law_roundtrip_jnp(x):
    """Same folded math as the kernel as one XLA elementwise fusion (small/unaligned path)."""
    xf = x.astype(jnp.float32)
    enc = jnp.sign(xf) * jnp.log1p(MU * jnp.abs(xf)) * ENC_SCALE
    q = jnp.floor(enc + ENC_BIAS)
    t = q - DEC_CENTER
    out = jnp.sign(t) * (jnp.exp(jnp.abs(t) * DEC_SCALE) - 1.0) * INV_MU
    return out.astype(x.dtype)


def _pallas_roundtrip_2d(x2d, *, max_block_bytes):
    rows, lanes = x2d.shape
    itemsize = x2d.dtype.itemsize
    sub = 8 * (4 // itemsize)            # sublane packing: 8 (f32), 16 (bf16/f16)

    if rows <= sub:
        row_tile = rows                  # first block dim == full array dim: allowed
    else:
        cap = max(sub, (max_block_bytes // (lanes * itemsize)) // sub * sub)
        # >= 2 grid steps when possible so ("parallel",) can use both v7x TensorCores.
        half = _round_up(_cdiv(rows, 2), sub)
        row_tile = min(cap, half)

    grid = (pl.cdiv(rows, row_tile),)    # partial last block is masked by Pallas
    spec = pl.BlockSpec((row_tile, lanes), lambda i: (i, 0))

    return pl.pallas_call(
        codec_sim_kernel,
        out_shape=jax.ShapeDtypeStruct((rows, lanes), x2d.dtype),
        grid=grid,
        in_specs=[spec],
        out_specs=spec,
        compiler_params=pltpu.CompilerParams(
            dimension_semantics=("parallel",),
            vmem_limit_bytes=32 * 1024 * 1024,
        ),
    )(x2d)


def codec_simulator(x: jax.Array, *, min_pallas_elems: int = 8192,
                    max_block_bytes: int = 2 * 1024 * 1024) -> jax.Array:
    """Mu-law encode+decode round trip (quantization_channels=64), purely elementwise."""
    if (not jnp.issubdtype(x.dtype, jnp.floating)) or x.dtype == jnp.float64:
        x = x.astype(jnp.float32)        # compute in f32 (matches default torchaudio use)

    n = x.size
    # Small inputs: a single fused XLA elementwise pass beats the pallas_call launch.
    if n < min_pallas_elems:
        return _mu_law_roundtrip_jnp(x)

    # Pick a lane width that divides n so the 2-D slab view is a free reshape (no pad copy).
    lanes = next((c for c in _LANE_CANDIDATES if n % c == 0), None)
    if lanes is None:
        # A tail pad would re-copy the whole array through HBM, costing more than the
        # mem-bound kernel itself; fall back to the fused XLA path for odd sizes.
        return _mu_law_roundtrip_jnp(x)

    out2d = _pallas_roundtrip_2d(x.reshape(n // lanes, lanes),
                                 max_block_bytes=max_block_bytes)
    return out2d.reshape(x.shape)


def _reference_torch_like(x):
    # Unfolded formulation mirroring torchaudio's op order, for validation.
    mu = jnp.float32(MU)
    log1p_mu = jnp.log1p(mu)
    xf = x.astype(jnp.float32)
    x_mu = jnp.sign(xf) * jnp.log1p(mu * jnp.abs(xf)) / log1p_mu
    q = jnp.trunc((x_mu + 1.0) / 2.0 * mu + 0.5)
    y = (q / mu) * 2.0 - 1.0
    return jnp.sign(y) * (jnp.exp(jnp.abs(y) * log1p_mu) - 1.0) / mu


if __name__ == "__main__":
    key = jax.random.PRNGKey(0)
    k1, k2 = jax.random.split(key)

    # Waveform batch large enough to take the Pallas path (batch=2, time=16384).
    x_big = jax.random.uniform(k1, (2, 16384), jnp.float32, minval=-1.0, maxval=1.0)
    out_big = jax.block_until_ready(codec_simulator(x_big))

    # Tiny waveform exercises the fused-XLA small-input fast path.
    x_small = jax.random.uniform(k2, (2, 1024), jnp.float32, minval=-1.0, maxval=1.0)
    out_small = jax.block_until_ready(codec_simulator(x_small))

    def check(out, x):
        assert out.shape == x.shape and out.dtype == x.dtype
        ref = _reference_torch_like(x)
        err = jnp.abs(out - ref)
        # Identical up to float rounding; inputs essentially on a quantization boundary
        # may land one bucket over due to constant folding (one step is < 0.13).
        assert float(jnp.max(err)) < 0.15, float(jnp.max(err))
        assert float(jnp.mean((err < 1e-5).astype(jnp.float32))) > 0.999

    check(out_big, x_big)
    check(out_small, x_small)

    print("KERNEL_OK")
</pallas_src>

<mosaic_0001>
module attributes {stable_mosaic.version = 11 : i64} {
  func.func @codec_sim_kernel(%arg0: i32, %arg1: memref<8x2048xf32, #tpu.memory_space<vmem>>, %arg2: memref<8x2048xf32, #tpu.memory_space<vmem>>) attributes {dimension_semantics = [#tpu.dimension_semantics<parallel>], iteration_bounds = array<i64: 2>, scalar_prefetch = 0 : i64, scratch_operands = 0 : i64, tpu.core_type = #tpu.core_type<tc>, window_params = [{transform_indices = @transform_0, window_bounds = array<i64: 8, 2048>}, {transform_indices = @transform_1, window_bounds = array<i64: 8, 2048>}]} {
    %c0 = arith.constant 0 : index
    %c0_0 = arith.constant 0 : index
    %0 = vector.load %arg1[%c0, %c0_0] : memref<8x2048xf32, #tpu.memory_space<vmem>>, vector<8x2048xf32>
    %1 = math.absf %0 : vector<8x2048xf32>
    %cst = arith.constant 6.300000e+01 : f32
    %2 = vector.broadcast %cst : f32 to vector<8x2048xf32>
    %3 = arith.mulf %2, %1 : vector<8x2048xf32>
    %4 = math.log1p %3 : vector<8x2048xf32>
    %cst_1 = arith.constant 7.57414913 : f32
    %5 = vector.broadcast %cst_1 : f32 to vector<8x2048xf32>
    %6 = arith.mulf %4, %5 : vector<8x2048xf32>
    %7 = tpu.bitcast %0 : vector<8x2048xf32> -> vector<8x2048xi32>
    %c-2147483648_i32 = arith.constant -2147483648 : i32
    %8 = vector.broadcast %c-2147483648_i32 : i32 to vector<8x2048xi32>
    %9 = arith.andi %7, %8 : vector<8x2048xi32>
    %10 = tpu.bitcast %6 : vector<8x2048xf32> -> vector<8x2048xi32>
    %11 = arith.ori %10, %9 : vector<8x2048xi32>
    %12 = tpu.bitcast %11 : vector<8x2048xi32> -> vector<8x2048xf32>
    %cst_2 = arith.constant 3.200000e+01 : f32
    %13 = vector.broadcast %cst_2 : f32 to vector<8x2048xf32>
    %14 = arith.addf %12, %13 : vector<8x2048xf32>
    %15 = math.floor %14 : vector<8x2048xf32>
    %cst_3 = arith.constant 3.150000e+01 : f32
    %16 = vector.broadcast %cst_3 : f32 to vector<8x2048xf32>
    %17 = arith.subf %15, %16 : vector<8x2048xf32>
    %18 = math.absf %17 : vector<8x2048xf32>
    %cst_4 = arith.constant 0.132028028 : f32
    %19 = vector.broadcast %cst_4 : f32 to vector<8x2048xf32>
    %20 = arith.mulf %18, %19 : vector<8x2048xf32>
    %21 = math.exp %20 : vector<8x2048xf32>
    %cst_5 = arith.constant 1.000000e+00 : f32
    %22 = vector.broadcast %cst_5 : f32 to vector<8x2048xf32>
    %23 = arith.subf %21, %22 : vector<8x2048xf32>
    %cst_6 = arith.constant 0.0158730168 : f32
    %24 = vector.broadcast %cst_6 : f32 to vector<8x2048xf32>
    %25 = arith.mulf %23, %24 : vector<8x2048xf32>
    %26 = tpu.bitcast %17 : vector<8x2048xf32> -> vector<8x2048xi32>
    %c-2147483648_i32_7 = arith.constant -2147483648 : i32
    %27 = vector.broadcast %c-2147483648_i32_7 : i32 to vector<8x2048xi32>
    %28 = arith.andi %26, %27 : vector<8x2048xi32>
    %29 = tpu.bitcast %25 : vector<8x2048xf32> -> vector<8x2048xi32>
    %30 = arith.ori %29, %28 : vector<8x2048xi32>
    %31 = tpu.bitcast %30 : vector<8x2048xi32> -> vector<8x2048xf32>
    %c0_8 = arith.constant 0 : index
    %c0_9 = arith.constant 0 : index
    %32 = vector.load %arg2[%c0_8, %c0_9] : memref<8x2048xf32, #tpu.memory_space<vmem>>, vector<8x2048xf32>
    tpu.vector_store %arg2[%c0_8, %c0_9], %31 {strides = array<i32>} : memref<8x2048xf32, #tpu.memory_space<vmem>>, vector<8x2048xf32>,
    return
  }
  func.func @transform_0(%arg0: i32) -> (i32, i32) {
    %c0_i32 = arith.constant 0 : i32
    %c0_i32_0 = arith.constant 0 : i32
    return %arg0, %c0_i32 : i32, i32
  }
  func.func @transform_1(%arg0: i32) -> (i32, i32) {
    %c0_i32 = arith.constant 0 : i32
    %c0_i32_0 = arith.constant 0 : i32
    return %arg0, %c0_i32 : i32, i32
  }
}

</mosaic_0001>

<llo_original>
// kernel: tpu_custom_call.1
$region0: #{tpu_custom_call.1}
  #allocation0 [shape = 'u32[]', space=smem, size = 0x4, offset = 0x4, fixed_abs, tag = 'smem constant byte address 0x4 - core index']
  #allocation1 [shape = 'u32[144,128]{1,0:T(1,128)}', space=vmem, size = 0x12000, scoped, tag = 'internal scratch']
  %s0 = inlined_call_operand.hbm [shape: f32[16,2048], index: 0, kind: input, shape index: {}]
  %s1 = inlined_call_operand.hbm [shape: f32[16,2048], index: 1, kind: output, shape index: {}]
  %s2 = sld [smem:[#allocation0]]
  $region41: #{tpu_custom_call.1} parent=0
    _
  %s4 = ssub.s32 1, %s2
  %s5 = scalar_select 0, %s4, %s2
  $region1: #{tpu_custom_call.1} parent=0
    #allocation2 [shape = 'u8[131072]{0}', space=vmem, size = 0x20000, scoped, tag = 'input window, operand 0']
    #allocation3 [shape = 's32[2]{0}', space=sflag, size = 0x8, scoped, tag = 'scoped memory for tpu_custom_call.1']
    #allocation4 [shape = 's32[2]{0}', space=sflag, size = 0x8, scoped, tag = 'scoped memory for tpu_custom_call.1']
    #allocation5 [shape = 'u8[131072]{0}', space=vmem, size = 0x20000, scoped, tag = 'output window, operand 0']
    %6 = vsyncpa [#allocation3], 0
    %s7 = scalar_lea.sflag [#allocation3], 1
    %8 = vsyncpa %s7, 0
    %9 = vsyncpa [#allocation4], 0
    %s10 = scalar_lea.sflag [#allocation4], 1
    %11 = vsyncpa %s10, 0
    loop: start=0, step=1, limit=4
    $region2: #{tpu_custom_call.1} parent=1 // loop_pre_header
      _
    $region3: #{tpu_custom_call.1} parent=1 // loop_header
      %s13 = sphi 0, %s17
      %p14 = scmp.ge.s32.totalorder %s13, 4
      %s23 = sphi 0, %s25
      %s26 = sphi 0, %s23
      %s27 = sphi 0, %s26
      %s43 = sphi 0, %s27
      %s49 = sphi 0, %s51
      %s52 = sphi 0, %s49
      %s53 = sphi 0, %s52
      %s69 = sphi 0, %s53
    $region4: #{tpu_custom_call.1} parent=1 // loop_header_branch
      %16 = sbr.rel (%p14) target = $region8
    $region5: #{tpu_custom_call.1} parent=1 // loop_body
      %s18 = ssub.s32 %s13, 1
      %s19 = ssub.s32 %s13, 2
      %s20 = sadd.s32 %s13, 1
      %s21 = ssub.s32 %s13, %s20
      %p22 = scmp.eq.s32.totalorder %s21, 0
      %s24 = sadd.s32 %s23, 1
      %s25 = scalar_select %p22, %s23, %s24
      %p28 = pneg %p22
      %p29 = scmp.eq.s32.totalorder %s13, 1
      %p30 = por %p28, %p29
      %p31 = scmp.ne.s32.totalorder %s23, %s26
      %p32 = scmp.eq.s32.totalorder %s13, 0
      %p33 = por %p31, %p32
      %p34 = scmp.ne.s32.totalorder %s23, %s26
      %p35 = scmp.eq.s32.totalorder %s18, 1
      %p36 = por %p34, %p35
      %p37 = scmp.ne.s32.totalorder %s26, %s27
      %p38 = scmp.eq.s32.totalorder %s18, 0
      %p39 = por %p37, %p38
      %p40 = scmp.ne.s32.totalorder %s26, %s27
      %p41 = scmp.eq.s32.totalorder %s19, 1
      %p42 = por %p40, %p41
      %p44 = scmp.ne.s32.totalorder %s27, %s43
      %p45 = scmp.eq.s32.totalorder %s19, 0
      %p46 = por %p44, %p45
      %s47 = ssub.s32 %s13, %s20
      %p48 = scmp.eq.s32.totalorder %s47, 0
      %s50 = sadd.s32 %s49, 1
      %s51 = scalar_select %p48, %s49, %s50
      %p54 = pneg %p48
      %p55 = scmp.eq.s32.totalorder %s13, 1
      %p56 = por %p54, %p55
      %p57 = scmp.ne.s32.totalorder %s49, %s52
      %p58 = scmp.eq.s32.totalorder %s13, 0
      %p59 = por %p57, %p58
      %p60 = scmp.ne.s32.totalorder %s49, %s52
      %p61 = scmp.eq.s32.totalorder %s18, 1
      %p62 = por %p60, %p61
      %p63 = scmp.ne.s32.totalorder %s52, %s53
      %p64 = scmp.eq.s32.totalorder %s18, 0
      %p65 = por %p63, %p64
      %p66 = scmp.ne.s32.totalorder %s52, %s53
      %p67 = scmp.eq.s32.totalorder %s19, 1
      %p68 = por %p66, %p67
      %p70 = scmp.ne.s32.totalorder %s53, %s69
      %p71 = scmp.eq.s32.totalorder %s19, 0
      %p72 = por %p70, %p71
      %p73 = scmp.le.s32.totalorder 1, %s13
      %p74 = scmp.lt.s32.totalorder %s13, 3
      %p75 = pnand %p73, %p74
      %p76 = pneg %p75
      // Predicated region
      $region9: #{tpu_custom_call.1} parent=5 // pred_check
        _
      $region10: #{tpu_custom_call.1} parent=5 // pred_check_branch
        %78 = sbr.rel (%p75) target = $region12
      $region11: #{tpu_custom_call.1} parent=5 // pred_region
        %s79 = ssub.s32 %s13, 1
      $region12: #{tpu_custom_call.1} parent=5 // pred_fallthru
        _
      %p80 = scmp.lt.s32.totalorder %s13, 2
      // Predicated region
      $region13: #{tpu_custom_call.1} parent=5 // pred_check
        %p81 = pneg %p80
      $region14: #{tpu_custom_call.1} parent=5 // pred_check_branch
        %83 = sbr.rel (%p81) target = $region16
      $region15: #{tpu_custom_call.1} parent=5 // pred_region
        // Predicated region
        $region17: #{tpu_custom_call.1} parent=15 // pred_check
          %p84 = pneg %p33
        $region18: #{tpu_custom_call.1} parent=15 // pred_check_branch
          %86 = sbr.rel (%p84) target = $region20
        $region19: #{tpu_custom_call.1} parent=15 // pred_region
          %s87 = sand.u32 %s23, 1
          %s88 = scalar_lea.sflag [#allocation3], %s87
          %s89 = sand.u32 %s23, 1
          %s90 = smul.addr %s89, 128
          %s91 = scalar_lea.vmem [#allocation2], %s90
          %s93 = ssub.s32 2048, 2048
          %94 = vsyncadd %s88, %s93
          %s95 = smul.addr %s13, 16
          %s96 = smul.addr %s95, 128
          %s97 = scalar_lea.hbm %s0, %s96
          %s99 = sshll.u32 %s91, 4
          %s100 = int_to_ptr.vmem [resolvable:$true] %s99
          %102 = dma.hbm_to_vmem [thread:$0]  %s97, 2048, %s100, %s88
        $region20: #{tpu_custom_call.1} parent=15 // pred_fallthru
          _
      $region16: #{tpu_custom_call.1} parent=5 // pred_fallthru
        _
      %p103 = scmp.le.s32.totalorder 1, %s13
      %p104 = scmp.lt.s32.totalorder %s13, 3
      %p105 = pnand %p103, %p104
      %p106 = pneg %p105
      // Predicated region
      $region21: #{tpu_custom_call.1} parent=5 // pred_check
        _
      $region22: #{tpu_custom_call.1} parent=5 // pred_check_branch
        %108 = sbr.rel (%p105) target = $region24
      $region23: #{tpu_custom_call.1} parent=5 // pred_region
        %s109 = ssub.s32 %s13, 1
        %s110 = sand.u32 %s26, 1
        %s111 = scalar_lea.sflag [#allocation3], %s110
        %s112 = sand.u32 %s26, 1
        %s113 = smul.addr %s112, 128
        %s114 = scalar_lea.vmem [#allocation2], %s113
        // Predicated region
        $region25: #{tpu_custom_call.1} parent=23 // pred_check
          %p115 = pneg %p39
        $region26: #{tpu_custom_call.1} parent=23 // pred_check_branch
          %117 = sbr.rel (%p115) target = $region28
        $region27: #{tpu_custom_call.1} parent=23 // pred_region
          %118 = dma.done %s111, 2048
        $region28: #{tpu_custom_call.1} parent=23 // pred_fallthru
          _
        %s119 = sand.u32 %s26, 1
        %s120 = scalar_lea.sflag [#allocation3], %s119
        %s121 = sand.u32 %s26, 1
        %s122 = smul.addr %s121, 128
        %s123 = scalar_lea.vmem [#allocation2], %s122
        %p124 = pneg %p39
        %p125 = pneg %p36
        %p126 = pneg %p65
        %p127 = pneg %p62
        %s128 = sand.u32 %s52, 1
        %s129 = scalar_lea.sflag [#allocation4], %s128
        %s130 = sand.u32 %s52, 1
        %s131 = smul.addr %s130, 128
        %s132 = scalar_lea.vmem [#allocation5], %s131
        %v133 = vld [vmem:[%s114] sm:$0xff]
        %v134 = vld [vmem:[%s114 + $0x8] sm:$0xff]
        %v135 = vld [vmem:[%s114 + $0x10] sm:$0xff]
        %v136 = vld [vmem:[%s114 + $0x18] sm:$0xff]
        %v137 = vld [vmem:[%s114 + $0x20] sm:$0xff]
        %v138 = vld [vmem:[%s114 + $0x28] sm:$0xff]
        %v139 = vld [vmem:[%s114 + $0x30] sm:$0xff]
        %v140 = vld [vmem:[%s114 + $0x38] sm:$0xff]
        %v141 = vld [vmem:[%s114 + $0x40] sm:$0xff]
        %v142 = vld [vmem:[%s114 + $0x48] sm:$0xff]
        %v143 = vld [vmem:[%s114 + $0x50] sm:$0xff]
        %v144 = vld [vmem:[%s114 + $0x58] sm:$0xff]
        %v145 = vld [vmem:[%s114 + $0x60] sm:$0xff]
        %v146 = vld [vmem:[%s114 + $0x68] sm:$0xff]
        %v147 = vld [vmem:[%s114 + $0x70] sm:$0xff]
        %v148 = vld [vmem:[%s114 + $0x78] sm:$0xff]
        %v149 = vand.u32 2147483647, %v133
        %v150 = vand.u32 2147483647, %v134
        %v151 = vand.u32 2147483647, %v135
        %v152 = vand.u32 2147483647, %v136
        %v153 = vand.u32 2147483647, %v137
        %v154 = vand.u32 2147483647, %v138
        %v155 = vand.u32 2147483647, %v139
        %v156 = vand.u32 2147483647, %v140
        %v157 = vand.u32 2147483647, %v141
        %v158 = vand.u32 2147483647, %v142
        %v159 = vand.u32 2147483647, %v143
        %v160 = vand.u32 2147483647, %v144
        %v161 = vand.u32 2147483647, %v145
        %v162 = vand.u32 2147483647, %v146
        %v163 = vand.u32 2147483647, %v147
        %v164 = vand.u32 2147483647, %v148
        %v165 = vmul.f32 %v149, 63.0
        %v166 = vmul.f32 %v150, 63.0
        %v167 = vmul.f32 %v151, 63.0
        %v168 = vmul.f32 %v152, 63.0
        %v169 = vmul.f32 %v153, 63.0
        %v170 = vmul.f32 %v154, 63.0
        %v171 = vmul.f32 %v155, 63.0
        %v172 = vmul.f32 %v156, 63.0
        %v173 = vmul.f32 %v157, 63.0
        %v174 = vmul.f32 %v158, 63.0
        %v175 = vmul.f32 %v159, 63.0
        %v176 = vmul.f32 %v160, 63.0
        %v177 = vmul.f32 %v161, 63.0
        %v178 = vmul.f32 %v162, 63.0
        %v179 = vmul.f32 %v163, 63.0
        %v180 = vmul.f32 %v164, 63.0
        %v181 = vadd.f32 %v165, 1.0
        %v182 = vlog2.pop %v181
        %v183 = vmul.f32 %v182, 0.6931472
        %v184 = vmul.f32 -0.5, %v165
        %v185 = vadd.f32 %v184, 1.0
        %v186 = vmul.f32 %v185, %v165
        %v187 = vand.u32 2147483647, %v165
        %vm188 = vcmp.lt.f32.partialorder %v187, 0.0004427343
        %v189 = vsel %vm188, %v186, %v183
        %v190 = vadd.f32 %v166, 1.0
        %v191 = vlog2.pop %v190
        %v192 = vmul.f32 %v191, 0.6931472
        %v193 = vmul.f32 -0.5, %v166
        %v194 = vadd.f32 %v193, 1.0
        %v195 = vmul.f32 %v194, %v166
        %v196 = vand.u32 2147483647, %v166
        %vm197 = vcmp.lt.f32.partialorder %v196, 0.0004427343
        %v198 = vsel %vm197, %v195, %v192
        %v199 = vadd.f32 %v167, 1.0
        %v200 = vlog2.pop %v199
        %v201 = vmul.f32 %v200, 0.6931472
        %v202 = vmul.f32 -0.5, %v167
        %v203 = vadd.f32 %v202, 1.0
        %v204 = vmul.f32 %v203, %v167
        %v205 = vand.u32 2147483647, %v167
        %vm206 = vcmp.lt.f32.partialorder %v205, 0.0004427343
        %v207 = vsel %vm206, %v204, %v201
        %v208 = vadd.f32 %v168, 1.0
        %v209 = vlog2.pop %v208
        %v210 = vmul.f32 %v209, 0.6931472
        %v211 = vmul.f32 -0.5, %v168
        %v212 = vadd.f32 %v211, 1.0
        %v213 = vmul.f32 %v212, %v168
        %v214 = vand.u32 2147483647, %v168
        %vm215 = vcmp.lt.f32.partialorder %v214, 0.0004427343
        %v216 = vsel %vm215, %v213, %v210
        %v217 = vadd.f32 %v169, 1.0
        %v218 = vlog2.pop %v217
        %v219 = vmul.f32 %v218, 0.6931472
        %v220 = vmul.f32 -0.5, %v169
        %v221 = vadd.f32 %v220, 1.0
        %v222 = vmul.f32 %v221, %v169
        %v223 = vand.u32 2147483647, %v169
        %vm224 = vcmp.lt.f32.partialorder %v223, 0.0004427343
        %v225 = vsel %vm224, %v222, %v219
        %v226 = vadd.f32 %v170, 1.0
        %v227 = vlog2.pop %v226
        %v228 = vmul.f32 %v227, 0.6931472
        %v229 = vmul.f32 -0.5, %v170
        %v230 = vadd.f32 %v229, 1.0
        %v231 = vmul.f32 %v230, %v170
        %v232 = vand.u32 2147483647, %v170
        %vm233 = vcmp.lt.f32.partialorder %v232, 0.0004427343
        %v234 = vsel %vm233, %v231, %v228
        %v235 = vadd.f32 %v171, 1.0
        %v236 = vlog2.pop %v235
        %v237 = vmul.f32 %v236, 0.6931472
        %v238 = vmul.f32 -0.5, %v171
        %v239 = vadd.f32 %v238, 1.0
        %v240 = vmul.f32 %v239, %v171
        %v241 = vand.u32 2147483647, %v171
        %vm242 = vcmp.lt.f32.partialorder %v241, 0.0004427343
        %v243 = vsel %vm242, %v240, %v237
        %v244 = vadd.f32 %v172, 1.0
        %v245 = vlog2.pop %v244
        %v246 = vmul.f32 %v245, 0.6931472
        %v247 = vmul.f32 -0.5, %v172
        %v248 = vadd.f32 %v247, 1.0
        %v249 = vmul.f32 %v248, %v172
        %v250 = vand.u32 2147483647, %v172
        %vm251 = vcmp.lt.f32.partialorder %v250, 0.0004427343
        %v252 = vsel %vm251, %v249, %v246
        %v253 = vadd.f32 %v173, 1.0
        %v254 = vlog2.pop %v253
        %v255 = vmul.f32 %v254, 0.6931472
        %v256 = vmul.f32 -0.5, %v173
        %v257 = vadd.f32 %v256, 1.0
        %v258 = vmul.f32 %v257, %v173
        %v259 = vand.u32 2147483647, %v173
        %vm260 = vcmp.lt.f32.partialorder %v259, 0.0004427343
        %v261 = vsel %vm260, %v258, %v255
        %v262 = vadd.f32 %v174, 1.0
        %v263 = vlog2.pop %v262
        %v264 = vmul.f32 %v263, 0.6931472
        %v265 = vmul.f32 -0.5, %v174
        %v266 = vadd.f32 %v265, 1.0
        %v267 = vmul.f32 %v266, %v174
        %v268 = vand.u32 2147483647, %v174
        %vm269 = vcmp.lt.f32.partialorder %v268, 0.0004427343
        %v270 = vsel %vm269, %v267, %v264
        %v271 = vadd.f32 %v175, 1.0
        %v272 = vlog2.pop %v271
        %v273 = vmul.f32 %v272, 0.6931472
        %v274 = vmul.f32 -0.5, %v175
        %v275 = vadd.f32 %v274, 1.0
        %v276 = vmul.f32 %v275, %v175
        %v277 = vand.u32 2147483647, %v175
        %vm278 = vcmp.lt.f32.partialorder %v277, 0.0004427343
        %v279 = vsel %vm278, %v276, %v273
        %v280 = vadd.f32 %v176, 1.0
        %v281 = vlog2.pop %v280
        %v282 = vmul.f32 %v281, 0.6931472
        %v283 = vmul.f32 -0.5, %v176
        %v284 = vadd.f32 %v283, 1.0
        %v285 = vmul.f32 %v284, %v176
        %v286 = vand.u32 2147483647, %v176
        %vm287 = vcmp.lt.f32.partialorder %v286, 0.0004427343
        %v288 = vsel %vm287, %v285, %v282
        %v289 = vadd.f32 %v177, 1.0
        %v290 = vlog2.pop %v289
        %v291 = vmul.f32 %v290, 0.6931472
        %v292 = vmul.f32 -0.5, %v177
        %v293 = vadd.f32 %v292, 1.0
        %v294 = vmul.f32 %v293, %v177
        %v295 = vand.u32 2147483647, %v177
        %vm296 = vcmp.lt.f32.partialorder %v295, 0.0004427343
        %v297 = vsel %vm296, %v294, %v291
        %v298 = vadd.f32 %v178, 1.0
        %v299 = vlog2.pop %v298
        %v300 = vmul.f32 %v299, 0.6931472
        %v301 = vmul.f32 -0.5, %v178
        %v302 = vadd.f32 %v301, 1.0
        %v303 = vmul.f32 %v302, %v178
        %v304 = vand.u32 2147483647, %v178
        %vm305 = vcmp.lt.f32.partialorder %v304, 0.0004427343
        %v306 = vsel %vm305, %v303, %v300
        %v307 = vadd.f32 %v179, 1.0
        %v308 = vlog2.pop %v307
        %v309 = vmul.f32 %v308, 0.6931472
        %v310 = vmul.f32 -0.5, %v179
        %v311 = vadd.f32 %v310, 1.0
        %v312 = vmul.f32 %v311, %v179
        %v313 = vand.u32 2147483647, %v179
        %vm314 = vcmp.lt.f32.partialorder %v313, 0.0004427343
        %v315 = vsel %vm314, %v312, %v309
        %v316 = vadd.f32 %v180, 1.0
        %v317 = vlog2.pop %v316
        %v318 = vmul.f32 %v317, 0.6931472
        %v319 = vmul.f32 -0.5, %v180
        %v320 = vadd.f32 %v319, 1.0
        %v321 = vmul.f32 %v320, %v180
        %v322 = vand.u32 2147483647, %v180
        %vm323 = vcmp.lt.f32.partialorder %v322, 0.0004427343
        %v324 = vsel %vm323, %v321, %v318
        %v325 = vmul.f32 %v189, 7.574149
        %v326 = vmul.f32 %v198, 7.574149
        %v327 = vmul.f32 %v207, 7.574149
        %v328 = vmul.f32 %v216, 7.574149
        %v329 = vmul.f32 %v225, 7.574149
        %v330 = vmul.f32 %v234, 7.574149
        %v331 = vmul.f32 %v243, 7.574149
        %v332 = vmul.f32 %v252, 7.574149
        %v333 = vmul.f32 %v261, 7.574149
        %v334 = vmul.f32 %v270, 7.574149
        %v335 = vmul.f32 %v279, 7.574149
        %v336 = vmul.f32 %v288, 7.574149
        %v337 = vmul.f32 %v297, 7.574149
        %v338 = vmul.f32 %v306, 7.574149
        %v339 = vmul.f32 %v315, 7.574149
        %v340 = vmul.f32 %v324, 7.574149
        %v357 = vand.u32 %v133, 2147483648
        %v358 = vand.u32 %v134, 2147483648
        %v359 = vand.u32 %v135, 2147483648
        %v360 = vand.u32 %v136, 2147483648
        %v361 = vand.u32 %v137, 2147483648
        %v362 = vand.u32 %v138, 2147483648
        %v363 = vand.u32 %v139, 2147483648
        %v364 = vand.u32 %v140, 2147483648
        %v365 = vand.u32 %v141, 2147483648
        %v366 = vand.u32 %v142, 2147483648
        %v367 = vand.u32 %v143, 2147483648
        %v368 = vand.u32 %v144, 2147483648
        %v369 = vand.u32 %v145, 2147483648
        %v370 = vand.u32 %v146, 2147483648
        %v371 = vand.u32 %v147, 2147483648
        %v372 = vand.u32 %v148, 2147483648
        %v389 = vor.u32 %v325, %v357
        %v390 = vor.u32 %v326, %v358
        %v391 = vor.u32 %v327, %v359
        %v392 = vor.u32 %v328, %v360
        %v393 = vor.u32 %v329, %v361
        %v394 = vor.u32 %v330, %v362
        %v395 = vor.u32 %v331, %v363
        %v396 = vor.u32 %v332, %v364
        %v397 = vor.u32 %v333, %v365
        %v398 = vor.u32 %v334, %v366
        %v399 = vor.u32 %v335, %v367
        %v400 = vor.u32 %v336, %v368
        %v401 = vor.u32 %v337, %v369
        %v402 = vor.u32 %v338, %v370
        %v403 = vor.u32 %v339, %v371
        %v404 = vor.u32 %v340, %v372
        %v421 = vadd.f32 %v389, 32.0
        %v422 = vadd.f32 %v390, 32.0
        %v423 = vadd.f32 %v391, 32.0
        %v424 = vadd.f32 %v392, 32.0
        %v425 = vadd.f32 %v393, 32.0
        %v426 = vadd.f32 %v394, 32.0
        %v427 = vadd.f32 %v395, 32.0
        %v428 = vadd.f32 %v396, 32.0
        %v429 = vadd.f32 %v397, 32.0
        %v430 = vadd.f32 %v398, 32.0
        %v431 = vadd.f32 %v399, 32.0
        %v432 = vadd.f32 %v400, 32.0
        %v433 = vadd.f32 %v401, 32.0
        %v434 = vadd.f32 %v402, 32.0
        %v435 = vadd.f32 %v403, 32.0
        %v436 = vadd.f32 %v404, 32.0
        %v437 = vfloor.f32 %v421
        %v438 = vfloor.f32 %v422
        %v439 = vfloor.f32 %v423
        %v440 = vfloor.f32 %v424
        %v441 = vfloor.f32 %v425
        %v442 = vfloor.f32 %v426
        %v443 = vfloor.f32 %v427
        %v444 = vfloor.f32 %v428
        %v445 = vfloor.f32 %v429
        %v446 = vfloor.f32 %v430
        %v447 = vfloor.f32 %v431
        %v448 = vfloor.f32 %v432
        %v449 = vfloor.f32 %v433
        %v450 = vfloor.f32 %v434
        %v451 = vfloor.f32 %v435
        %v452 = vfloor.f32 %v436
        %v453 = vsub.f32 %v437, 31.5
        %v454 = vsub.f32 %v438, 31.5
        %v455 = vsub.f32 %v439, 31.5
        %v456 = vsub.f32 %v440, 31.5
        %v457 = vsub.f32 %v441, 31.5
        %v458 = vsub.f32 %v442, 31.5
        %v459 = vsub.f32 %v443, 31.5
        %v460 = vsub.f32 %v444, 31.5
        %v461 = vsub.f32 %v445, 31.5
        %v462 = vsub.f32 %v446, 31.5
        %v463 = vsub.f32 %v447, 31.5
        %v464 = vsub.f32 %v448, 31.5
        %v465 = vsub.f32 %v449, 31.5
        %v466 = vsub.f32 %v450, 31.5
        %v467 = vsub.f32 %v451, 31.5
        %v468 = vsub.f32 %v452, 31.5
        %v469 = vand.u32 2147483647, %v453
        %v470 = vand.u32 2147483647, %v454
        %v471 = vand.u32 2147483647, %v455
        %v472 = vand.u32 2147483647, %v456
        %v473 = vand.u32 2147483647, %v457
        %v474 = vand.u32 2147483647, %v458
        %v475 = vand.u32 2147483647, %v459
        %v476 = vand.u32 2147483647, %v460
        %v477 = vand.u32 2147483647, %v461
        %v478 = vand.u32 2147483647, %v462
        %v479 = vand.u32 2147483647, %v463
        %v480 = vand.u32 2147483647, %v464
        %v481 = vand.u32 2147483647, %v465
        %v482 = vand.u32 2147483647, %v466
        %v483 = vand.u32 2147483647, %v467
        %v484 = vand.u32 2147483647, %v468
        %v485 = vmul.f32 %v469, 0.13202803
        %v486 = vmul.f32 %v470, 0.13202803
        %v487 = vmul.f32 %v471, 0.13202803
        %v488 = vmul.f32 %v472, 0.13202803
        %v489 = vmul.f32 %v473, 0.13202803
        %v490 = vmul.f32 %v474, 0.13202803
        %v491 = vmul.f32 %v475, 0.13202803
        %v492 = vmul.f32 %v476, 0.13202803
        %v493 = vmul.f32 %v477, 0.13202803
        %v494 = vmul.f32 %v478, 0.13202803
        %v495 = vmul.f32 %v479, 0.13202803
        %v496 = vmul.f32 %v480, 0.13202803
        %v497 = vmul.f32 %v481, 0.13202803
        %v498 = vmul.f32 %v482, 0.13202803
        %v499 = vmul.f32 %v483, 0.13202803
        %v500 = vmul.f32 %v484, 0.13202803
        %v501 = vmul.f32 %v485, 1.442695
        %v502 = vpow.pop %v501
        %v503 = vmul.f32 %v486, 1.442695
        %v504 = vpow.pop %v503
        %v505 = vmul.f32 %v487, 1.442695
        %v506 = vpow.pop %v505
        %v507 = vmul.f32 %v488, 1.442695
        %v508 = vpow.pop %v507
        %v509 = vmul.f32 %v489, 1.442695
        %v510 = vpow.pop %v509
        %v511 = vmul.f32 %v490, 1.442695
        %v512 = vpow.pop %v511
        %v513 = vmul.f32 %v491, 1.442695
        %v514 = vpow.pop %v513
        %v515 = vmul.f32 %v492, 1.442695
        %v516 = vpow.pop %v515
        %v517 = vmul.f32 %v493, 1.442695
        %v518 = vpow.pop %v517
        %v519 = vmul.f32 %v494, 1.442695
        %v520 = vpow.pop %v519
        %v521 = vmul.f32 %v495, 1.442695
        %v522 = vpow.pop %v521
        %v523 = vmul.f32 %v496, 1.442695
        %v524 = vpow.pop %v523
        %v525 = vmul.f32 %v497, 1.442695
        %v526 = vpow.pop %v525
        %v527 = vmul.f32 %v498, 1.442695
        %v528 = vpow.pop %v527
        %v529 = vmul.f32 %v499, 1.442695
        %v530 = vpow.pop %v529
        %v531 = vmul.f32 %v500, 1.442695
        %v532 = vpow.pop %v531
        %v533 = vsub.f32 %v502, 1.0
        %v534 = vsub.f32 %v504, 1.0
        %v535 = vsub.f32 %v506, 1.0
        %v536 = vsub.f32 %v508, 1.0
        %v537 = vsub.f32 %v510, 1.0
        %v538 = vsub.f32 %v512, 1.0
        %v539 = vsub.f32 %v514, 1.0
        %v540 = vsub.f32 %v516, 1.0
        %v541 = vsub.f32 %v518, 1.0
        %v542 = vsub.f32 %v520, 1.0
        %v543 = vsub.f32 %v522, 1.0
        %v544 = vsub.f32 %v524, 1.0
        %v545 = vsub.f32 %v526, 1.0
        %v546 = vsub.f32 %v528, 1.0
        %v547 = vsub.f32 %v530, 1.0
        %v548 = vsub.f32 %v532, 1.0
        %v549 = vmul.f32 %v533, 0.015873017
        %v550 = vmul.f32 %v534, 0.015873017
        %v551 = vmul.f32 %v535, 0.015873017
        %v552 = vmul.f32 %v536, 0.015873017
        %v553 = vmul.f32 %v537, 0.015873017
        %v554 = vmul.f32 %v538, 0.015873017
        %v555 = vmul.f32 %v539, 0.015873017
        %v556 = vmul.f32 %v540, 0.015873017
        %v557 = vmul.f32 %v541, 0.015873017
        %v558 = vmul.f32 %v542, 0.015873017
        %v559 = vmul.f32 %v543, 0.015873017
        %v560 = vmul.f32 %v544, 0.015873017
        %v561 = vmul.f32 %v545, 0.015873017
        %v562 = vmul.f32 %v546, 0.015873017
        %v563 = vmul.f32 %v547, 0.015873017
        %v564 = vmul.f32 %v548, 0.015873017
        %v581 = vand.u32 %v453, 2147483648
        %v582 = vand.u32 %v454, 2147483648
        %v583 = vand.u32 %v455, 2147483648
        %v584 = vand.u32 %v456, 2147483648
        %v585 = vand.u32 %v457, 2147483648
        %v586 = vand.u32 %v458, 2147483648
        %v587 = vand.u32 %v459, 2147483648
        %v588 = vand.u32 %v460, 2147483648
        %v589 = vand.u32 %v461, 2147483648
        %v590 = vand.u32 %v462, 2147483648
        %v591 = vand.u32 %v463, 2147483648
        %v592 = vand.u32 %v464, 2147483648
        %v593 = vand.u32 %v465, 2147483648
        %v594 = vand.u32 %v466, 2147483648
        %v595 = vand.u32 %v467, 2147483648
        %v596 = vand.u32 %v468, 2147483648
        %v613 = vor.u32 %v549, %v581
        %v614 = vor.u32 %v550, %v582
        %v615 = vor.u32 %v551, %v583
        %v616 = vor.u32 %v552, %v584
        %v617 = vor.u32 %v553, %v585
        %v618 = vor.u32 %v554, %v586
        %v619 = vor.u32 %v555, %v587
        %v620 = vor.u32 %v556, %v588
        %v621 = vor.u32 %v557, %v589
        %v622 = vor.u32 %v558, %v590
        %v623 = vor.u32 %v559, %v591
        %v624 = vor.u32 %v560, %v592
        %v625 = vor.u32 %v561, %v593
        %v626 = vor.u32 %v562, %v594
        %v627 = vor.u32 %v563, %v595
        %v628 = vor.u32 %v564, %v596
        %645 = vst [vmem:[%s132] sm:$0xff] %v613
        %646 = vst [vmem:[%s132 + $0x8] sm:$0xff] %v614
        %647 = vst [vmem:[%s132 + $0x10] sm:$0xff] %v615
        %648 = vst [vmem:[%s132 + $0x18] sm:$0xff] %v616
        %649 = vst [vmem:[%s132 + $0x20] sm:$0xff] %v617
        %650 = vst [vmem:[%s132 + $0x28] sm:$0xff] %v618
        %651 = vst [vmem:[%s132 + $0x30] sm:$0xff] %v619
        %652 = vst [vmem:[%s132 + $0x38] sm:$0xff] %v620
        %653 = vst [vmem:[%s132 + $0x40] sm:$0xff] %v621
        %654 = vst [vmem:[%s132 + $0x48] sm:$0xff] %v622
        %655 = vst [vmem:[%s132 + $0x50] sm:$0xff] %v623
        %656 = vst [vmem:[%s132 + $0x58] sm:$0xff] %v624
        %657 = vst [vmem:[%s132 + $0x60] sm:$0xff] %v625
        %658 = vst [vmem:[%s132 + $0x68] sm:$0xff] %v626
        %659 = vst [vmem:[%s132 + $0x70] sm:$0xff] %v627
        %660 = vst [vmem:[%s132 + $0x78] sm:$0xff] %v628
        %s661 = sand.u32 %s52, 1
        %s662 = scalar_lea.sflag [#allocation4], %s661
        %s663 = sand.u32 %s52, 1
        %s664 = smul.addr %s663, 128
        %s665 = scalar_lea.vmem [#allocation5], %s664
        // Predicated region
        $region29: #{tpu_custom_call.1} parent=23 // pred_check
          %p666 = pneg %p62
        $region30: #{tpu_custom_call.1} parent=23 // pred_check_branch
          %668 = sbr.rel (%p666) target = $region32
        $region31: #{tpu_custom_call.1} parent=23 // pred_region
          %s670 = ssub.s32 2048, 2048
          %671 = vsyncadd %s662, %s670
          %s672 = smul.addr %s18, 16
          %s673 = smul.addr %s672, 128
          %s674 = scalar_lea.hbm %s1, %s673
          %s676 = sshll.u32 %s665, 4
          %s677 = int_to_ptr.vmem [resolvable:$true] %s676
          %679 = dma.vmem_to_hbm [thread:$0]  %s677, 2048, %s674, %s662
        $region32: #{tpu_custom_call.1} parent=23 // pred_fallthru
          _
      $region24: #{tpu_custom_call.1} parent=5 // pred_fallthru
        _
      %p680 = scmp.le.s32.totalorder 2, %s13
      // Predicated region
      $region33: #{tpu_custom_call.1} parent=5 // pred_check
        %p681 = pneg %p680
      $region34: #{tpu_custom_call.1} parent=5 // pred_check_branch
        %683 = sbr.rel (%p681) target = $region36
      $region35: #{tpu_custom_call.1} parent=5 // pred_region
        %s684 = ssub.s32 %s13, 2
        // Predicated region
        $region37: #{tpu_custom_call.1} parent=35 // pred_check
          %p685 = pneg %p68
        $region38: #{tpu_custom_call.1} parent=35 // pred_check_branch
          %687 = sbr.rel (%p685) target = $region40
        $region39: #{tpu_custom_call.1} parent=35 // pred_region
          %s688 = sand.u32 %s53, 1
          %s689 = scalar_lea.sflag [#allocation4], %s688
          %s690 = sand.u32 %s53, 1
          %s691 = smul.addr %s690, 128
          %s692 = scalar_lea.vmem [#allocation5], %s691
          %693 = dma.done %s689, 2048
        $region40: #{tpu_custom_call.1} parent=35 // pred_fallthru
          _
      $region36: #{tpu_custom_call.1} parent=5 // pred_fallthru
        _
    $region6: #{tpu_custom_call.1} parent=1 // loop_footer
      %s17 = sadd.s32 1, %s13
    $region7: #{tpu_custom_call.1} parent=1 // loop_footer_branch
      %12 = sbr.rel target = $region3
    $region8: #{tpu_custom_call.1} parent=1 // loop_exit
      _
    %694 = vsyncpa [#allocation3], 1
    %s695 = scalar_lea.sflag [#allocation3], 1
    %696 = vsyncpa %s695, 1
    %697 = vsyncpa [#allocation4], 1
    %s698 = scalar_lea.sflag [#allocation4], 1
    %699 = vsyncpa %s698, 1

</llo_original>
